<compile_context>
chip_gen: v7x
topology: tpu7x:2x2x1
jax: 0.10.0
libtpu: 0.0.40
codegen_flags: <defaults>
</compile_context>

<pallas_src>
import jax
import jax.numpy as jnp
import numpy as np
from jax import lax
from jax.experimental import pallas as pl
from jax.experimental.pallas import tpu as pltpu


_TILE_BYTES = 2 * 1024 * 1024      # ~2 MiB per streamed block (>=85% of HBM roofline)
_FUSED_BYTES = 4 * 1024 * 1024     # fused single-kernel path if x fits in this


def _pick_tile(total, row_bytes, max_bytes=_TILE_BYTES, min_steps=8):
    """Rows per tile: <= max_bytes of data, multiple of 8, and small enough that
    the grid has >= min_steps steps (pipelining + v7x 2-TC sharding)."""
    t = max(8, int(max_bytes) // max(int(row_bytes), 1))
    t = min(t, max(8, pl.cdiv(total, min_steps)))
    t = max(8, (t // 8) * 8)
    if t >= total:
        return total        # single full block (block == full dim is always legal)
    return t


def _vmem_limit_bytes(block_bytes):
    """Double-buffered blocks + slack, clamped to a safe [8, 32] MiB window."""
    need = 2 * int(sum(block_bytes)) + (4 << 20)
    return int(min(max(need, 8 << 20), 32 << 20))


# ---------------------------------------------------------------------------
# Kernels
# ---------------------------------------------------------------------------
def _make_fused_inter_path_kernel(P, N, H, A):
    """Whole op in one kernel: x is read from HBM exactly once."""
    flat_ok = (N % 8 == 0)          # sublane-aligned flatten of (P, N) -> P*N
    inv_n = 1.0 / float(N)

    def kernel(x_ref, w1_ref, b1_ref, w2_ref, o_ref):
        w1 = w1_ref[...]                              # (H, A), same dtype as x
        b1 = b1_ref[...].astype(jnp.float32)          # (1, A)
        w2 = w2_ref[...].astype(jnp.float32)          # (1, A)

        if flat_ok:
            xt = x_ref[...].reshape(P * N, H)         # one big-M MXU push
            h = jnp.tanh(
                jnp.dot(xt, w1, preferred_element_type=jnp.float32) + b1)

        # Per-path attention logit: mean_n tanh(fc1(x_p)) @ w2^T  (shape (1,1)).
        logits = []
        for p in range(P):                            # P is tiny -> static unroll
            if flat_ok:
                hp = h[p * N:(p + 1) * N, :]
            else:
                hp = jnp.tanh(
                    jnp.dot(x_ref[p], w1, preferred_element_type=jnp.float32) + b1)
            logits.append(jnp.sum(hp * w2, keepdims=True) * inv_n)   # (1, 1)

        # Numerically-stable softmax over the P logits (all tiny (1,1) arrays).
        mx = logits[0]
        for p in range(1, P):
            mx = jnp.maximum(mx, logits[p])
        exps = [jnp.exp(l - mx) for l in logits]
        z = exps[0]
        for p in range(1, P):
            z = z + exps[p]
        inv_z = 1.0 / z

        # Attention-weighted sum over metapaths (f32 accumulation).
        acc = (exps[0] * inv_z) * x_ref[0].astype(jnp.float32)
        for p in range(1, P):
            acc = acc + (exps[p] * inv_z) * x_ref[p].astype(jnp.float32)
        o_ref[...] = acc.astype(o_ref.dtype)

    return kernel


def _make_fc1_tanh_sum_kernel(P, tile_n, H, A, n_total, need_mask):
    """Per-node-tile, per-path sum of tanh(fc1(x))  ->  out_ref (P, A)."""
    flat_ok = (tile_n % 8 == 0)

    def kernel(x_ref, w1_ref, b1_ref, out_ref):
        w1 = w1_ref[...]                              # (H, A) resident
        b1 = b1_ref[...].astype(jnp.float32)          # (1, A) resident

        if need_mask:
            i = pl.program_id(0)
            row = lax.broadcasted_iota(jnp.int32, (tile_n, 1), 0)
            mask = (i * tile_n + row) < n_total       # valid-node mask, last tile

        if flat_ok:
            xt = x_ref[...].reshape(P * tile_n, H)    # one flattened MXU matmul
            h = jnp.tanh(
                jnp.dot(xt, w1, preferred_element_type=jnp.float32) + b1)

        for p in range(P):                            # static unroll, P tiny
            if flat_ok:
                hp = h[p * tile_n:(p + 1) * tile_n, :]
            else:
                hp = jnp.tanh(
                    jnp.dot(x_ref[p], w1, preferred_element_type=jnp.float32) + b1)
            if need_mask:
                hp = jnp.where(mask, hp, 0.0)
            # Write rows directly (no concatenate of sub-vreg pieces).
            out_ref[p:p + 1, :] = jnp.sum(hp, axis=0, keepdims=True)

    return kernel


def _make_weighted_path_sum_kernel(P):
    """out = sum_p a[p] * x[p] for one tile; a in SMEM, f32 accumulation."""
    def kernel(a_ref, x_ref, out_ref):
        acc = a_ref[0] * x_ref[0].astype(jnp.float32)
        for p in range(1, P):                         # static unroll
            acc = acc + a_ref[p] * x_ref[p].astype(jnp.float32)
        out_ref[...] = acc.astype(out_ref.dtype)
    return kernel


# ---------------------------------------------------------------------------
# Wrappers
# ---------------------------------------------------------------------------
def _fc1_tanh_partial_sums(x, w1_t, b1_row):
    """Pass 1: (n_blocks, P, A) partial sums of tanh(fc1(x)) over node tiles."""
    P, N, H = x.shape
    A = w1_t.shape[1]
    itemsize = jnp.dtype(x.dtype).itemsize

    tile_n = _pick_tile(N, P * H * itemsize)
    n_blocks = pl.cdiv(N, tile_n)
    need_mask = (N % tile_n) != 0
    kernel = _make_fc1_tanh_sum_kernel(P, tile_n, H, A, N, need_mask)

    blk = (P * tile_n * H * itemsize, H * A * itemsize, A * 4, P * A * 4)
    return pl.pallas_call(
        kernel,
        out_shape=jax.ShapeDtypeStruct((n_blocks, P, A), jnp.float32),
        grid=(n_blocks,),
        in_specs=[
            pl.BlockSpec((P, tile_n, H), lambda k: (0, k, 0)),
            pl.BlockSpec((H, A), lambda k: (0, 0)),    # resident weight
            pl.BlockSpec((1, A), lambda k: (0, 0)),    # resident bias
        ],
        out_specs=pl.BlockSpec((None, P, A), lambda k: (k, 0, 0)),
        compiler_params=pltpu.CompilerParams(
            dimension_semantics=("parallel",),
            vmem_limit_bytes=_vmem_limit_bytes(blk)),
        cost_estimate=pl.CostEstimate(
            flops=2 * P * N * H * A + 2 * P * N * A,
            transcendentals=P * N * A,
            bytes_accessed=itemsize * (P * N * H + H * A)
                           + 4 * (A + n_blocks * P * A)),
    )(x, w1_t, b1_row)


def _path_weighted_sum(x, weights):
    """sum_p weights[p] * x[p]  for x: (P, N, H), weights: (P,) -> (N, H)."""
    P, N, H = x.shape
    F = N * H
    dtype = x.dtype
    itemsize = jnp.dtype(dtype).itemsize
    weights = weights.astype(jnp.float32)
    kernel = _make_weighted_path_sum_kernel(P)

    if F % 128 == 0:
        # Lane-dense view: unmasked 128-wide loads/stores (key when H < 128).
        R = F // 128
        x_v = x.reshape(P, R, 128)
        tile_r = _pick_tile(R, (P + 1) * 128 * itemsize)
        grid = (pl.cdiv(R, tile_r),)
        in_specs = [
            pl.BlockSpec(memory_space=pltpu.MemorySpace.SMEM),
            pl.BlockSpec((P, tile_r, 128), lambda i: (0, i, 0)),
        ]
        out_specs = pl.BlockSpec((tile_r, 128), lambda i: (i, 0))
        out_shape = jax.ShapeDtypeStruct((R, 128), dtype)
        blk = (P * tile_r * 128 * itemsize, tile_r * 128 * itemsize)
    else:
        # Fallback: tile over N, keep the (tile_n, H) layout (partial last tile OK:
        # out-of-bounds reads are garbage only in rows whose writes are dropped).
        tile_n = _pick_tile(N, (P + 1) * H * itemsize)
        grid = (pl.cdiv(N, tile_n),)
        x_v = x
        in_specs = [
            pl.BlockSpec(memory_space=pltpu.MemorySpace.SMEM),
            pl.BlockSpec((P, tile_n, H), lambda i: (0, i, 0)),
        ]
        out_specs = pl.BlockSpec((tile_n, H), lambda i: (i, 0))
        out_shape = jax.ShapeDtypeStruct((N, H), dtype)
        blk = (P * tile_n * H * itemsize, tile_n * H * itemsize)

    out = pl.pallas_call(
        kernel,
        out_shape=out_shape,
        grid=grid,
        in_specs=in_specs,
        out_specs=out_specs,
        compiler_params=pltpu.CompilerParams(
            dimension_semantics=("parallel",),
            vmem_limit_bytes=_vmem_limit_bytes(blk)),
        cost_estimate=pl.CostEstimate(
            flops=2 * P * F,
            transcendentals=0,
            bytes_accessed=itemsize * (P * F + F) + 4 * P),
    )(weights, x_v)
    return out.reshape(N, H)


def inter_path_att(metapath_outs, fc1_w, fc1_b, fc2_w, *, force_tiled=False):
    """metapath_outs: (P, N, H); fc1_w: (A, H); fc1_b: (A,); fc2_w: (1, A)."""
    P, N, H = metapath_outs.shape
    A = fc1_w.shape[0]
    x = metapath_outs                      # native dtype: no f32 copy in HBM
    itemsize = jnp.dtype(x.dtype).itemsize

    w1_t = fc1_w.T.astype(x.dtype)                      # (H, A); bf16 MXU if x is bf16
    b1_row = fc1_b.reshape(1, A).astype(jnp.float32)
    w2_row = fc2_w.reshape(1, A).astype(jnp.float32)

    x_bytes = P * N * H * itemsize
    h_bytes = P * N * A * 4
    fused_ok = (not force_tiled) and x_bytes <= _FUSED_BYTES and h_bytes <= _FUSED_BYTES

    if fused_ok:
        # ---- fused single-kernel fast path: x touches HBM exactly once ----
        kernel = _make_fused_inter_path_kernel(P, N, H, A)
        limit = int(min(max(6 * x_bytes + 4 * h_bytes + (4 << 20), 8 << 20), 32 << 20))
        return pl.pallas_call(
            kernel,
            out_shape=jax.ShapeDtypeStruct((N, H), x.dtype),
            in_specs=[pl.BlockSpec(memory_space=pltpu.MemorySpace.VMEM)] * 4,
            out_specs=pl.BlockSpec(memory_space=pltpu.MemorySpace.VMEM),
            compiler_params=pltpu.CompilerParams(vmem_limit_bytes=limit),
            cost_estimate=pl.CostEstimate(
                flops=2 * P * N * H * A + 2 * P * N * A + 2 * P * N * H,
                transcendentals=P * N * A + 2 * P,
                bytes_accessed=itemsize * (P * N * H + N * H + H * A) + 4 * 2 * A),
        )(x, w1_t, b1_row, w2_row)

    # ---- tiled two-pass path (x too large for a resident VMEM tile) ----
    # TODO(synk): for H<<128 and compute-bound pass 1, lane-pack x to (.., 128) with a
    # block-diagonal replicated W1 to recover lane occupancy; not needed while HBM-bound.
    partial = _fc1_tanh_partial_sums(x, w1_t, b1_row)        # (n_blocks, P, A)

    # Tiny (P, A) tail in plain JAX: mean over nodes, fc2, softmax over paths.
    m = jnp.sum(partial, axis=0) * (1.0 / N)                  # (P, A)
    s = m @ fc2_w.reshape(A, 1).astype(jnp.float32)           # (P, 1)
    a = jax.nn.softmax(s, axis=0).reshape(P)                  # (P,)

    # Lane-dense attention-weighted sum over metapaths.
    return _path_weighted_sum(x, a)


def intra_path_att(metapath_outs):
    P = metapath_outs.shape[0]
    # Plain sum over the metapath axis == weighted sum with unit weights;
    # reuses the tiled, lane-dense, bandwidth-optimal kernel (native dtype DMA).
    return _path_weighted_sum(metapath_outs, jnp.ones((P,), jnp.float32))


def inter_path_att_module(metapath_outs, params, sub_att="inter_path"):
    """Mirror of InterPathAtt.forward."""
    if sub_att == "intra_path":
        return intra_path_att(metapath_outs)
    return inter_path_att(metapath_outs, params["fc1_w"], params["fc1_b"],
                          params["fc2_w"])


# ---------------------------------------------------------------------------
# Pure-JAX reference (semantics of the PyTorch forward)
# ---------------------------------------------------------------------------
def ref_forward(metapath_outs, params, sub_att="inter_path"):
    x = metapath_outs.astype(jnp.float32)
    if sub_att == "intra_path":
        return jnp.sum(x, axis=0)
    h = jnp.tanh(x @ params["fc1_w"].T + params["fc1_b"])
    m = jnp.mean(h, axis=1)                       # (P, A)
    s = m @ params["fc2_w"].T                     # (P, 1)
    a = jax.nn.softmax(s, axis=0).squeeze(-1)     # (P,)
    return jnp.sum(x * a[:, None, None], axis=0)


# ---------------------------------------------------------------------------
if __name__ == "__main__":
    key = jax.random.PRNGKey(0)

    def make_case(k, P, N, H, A):
        kx, kw1, kb1, kw2 = jax.random.split(k, 4)
        x = jax.random.normal(kx, (P, N, H), dtype=jnp.float32)
        params = {
            "fc1_w": 0.1 * jax.random.normal(kw1, (A, H), dtype=jnp.float32),
            "fc1_b": 0.1 * jax.random.normal(kb1, (A,), dtype=jnp.float32),
            "fc2_w": 0.1 * jax.random.normal(kw2, (1, A), dtype=jnp.float32),
        }
        return x, params

    k1, k2 = jax.random.split(key)
    cases = [
        make_case(k1, 4, 16, 32, 16),   # aligned: fused fast path + lane-dense pass 2
        make_case(k2, 3, 37, 32, 16),   # ragged N: masked tiles / fallback layouts
    ]

    for x, params in cases:
        P, N, H = x.shape
        ref_inter = ref_forward(x, params, "inter_path")
        ref_intra = ref_forward(x, params, "intra_path")

        # inter_path: fused single-kernel path (auto for these sizes)
        out_fused = jax.block_until_ready(
            inter_path_att_module(x, params, "inter_path"))
        # inter_path: force the tiled two-pass path to validate it too
        out_tiled = jax.block_until_ready(
            inter_path_att(x, params["fc1_w"], params["fc1_b"], params["fc2_w"],
                           force_tiled=True))
        # intra_path: plain sum over metapaths
        out_intra = jax.block_until_ready(
            inter_path_att_module(x, params, "intra_path"))

        assert out_fused.shape == (N, H)
        assert out_tiled.shape == (N, H)
        assert out_intra.shape == (N, H)
        np.testing.assert_allclose(np.asarray(out_fused), np.asarray(ref_inter),
                                   rtol=1e-5, atol=1e-5)
        np.testing.assert_allclose(np.asarray(out_tiled), np.asarray(ref_inter),
                                   rtol=1e-5, atol=1e-5)
        np.testing.assert_allclose(np.asarray(out_intra), np.asarray(ref_intra),
                                   rtol=1e-5, atol=1e-5)

    # Native-dtype path: bf16 input is DMA'd as bf16, matmuls run bf16 on the MXU
    # with f32 accumulation (looser tolerance vs. the f32 reference).
    x_bf16 = cases[0][0].astype(jnp.bfloat16)
    out_bf16 = jax.block_until_ready(
        inter_path_att_module(x_bf16, cases[0][1], "inter_path"))
    np.testing.assert_allclose(np.asarray(out_bf16, dtype=np.float32),
                               np.asarray(ref_forward(x_bf16, cases[0][1],
                                                      "inter_path")),
                               rtol=2e-2, atol=2e-2)

    print("KERNEL_OK")
</pallas_src>

<mosaic_0001>
module attributes {stable_mosaic.version = 11 : i64} {
  func.func @kernel(%arg0: memref<4x16x32xf32, #tpu.memory_space<vmem>>, %arg1: memref<32x16xf32, #tpu.memory_space<vmem>>, %arg2: memref<1x16xf32, #tpu.memory_space<vmem>>, %arg3: memref<1x16xf32, #tpu.memory_space<vmem>>, %arg4: memref<16x32xf32, #tpu.memory_space<vmem>>) attributes {dimension_semantics = [], scalar_prefetch = 0 : i64, scratch_operands = 0 : i64, tpu.core_type = #tpu.core_type<tc>} {
    %c0 = arith.constant 0 : index
    %c0_0 = arith.constant 0 : index
    %0 = vector.load %arg1[%c0, %c0_0] : memref<32x16xf32, #tpu.memory_space<vmem>>, vector<32x16xf32>
    %c0_1 = arith.constant 0 : index
    %c0_2 = arith.constant 0 : index
    %1 = vector.load %arg2[%c0_1, %c0_2] : memref<1x16xf32, #tpu.memory_space<vmem>>, vector<1x16xf32>
    %c0_3 = arith.constant 0 : index
    %c0_4 = arith.constant 0 : index
    %2 = vector.load %arg3[%c0_3, %c0_4] : memref<1x16xf32, #tpu.memory_space<vmem>>, vector<1x16xf32>
    %c0_5 = arith.constant 0 : index
    %c0_6 = arith.constant 0 : index
    %c0_7 = arith.constant 0 : index
    %3 = vector.load %arg0[%c0_5, %c0_6, %c0_7] : memref<4x16x32xf32, #tpu.memory_space<vmem>>, vector<4x16x32xf32>
    %4 = vector.shape_cast %3 : vector<4x16x32xf32> to vector<64x32xf32>
    %cst = arith.constant dense<0.000000e+00> : vector<64x16xf32>
    %5 = tpu.matmul %4, %0, %cst {dimension_numbers = #tpu.dot_dimension_numbers<[1], [0], [0], [1], [0, 0, 1, 1], [], []>} : vector<64x32xf32>, vector<32x16xf32>, vector<64x16xf32> -> vector<64x16xf32>
    %6 = vector.broadcast %1 : vector<1x16xf32> to vector<64x16xf32>
    %7 = arith.addf %5, %6 : vector<64x16xf32>
    %8 = math.tanh %7 : vector<64x16xf32>
    %9 = vector.extract_strided_slice %8 {offsets = [0, 0], sizes = [16, 16], strides = [1, 1]} : vector<64x16xf32> to vector<16x16xf32>
    %10 = vector.broadcast %2 : vector<1x16xf32> to vector<16x16xf32>
    %11 = arith.mulf %9, %10 : vector<16x16xf32>
    %12 = vector.shape_cast %11 : vector<16x16xf32> to vector<1x16x16xf32>
    %cst_8 = arith.constant dense<0.000000e+00> : vector<1xf32>
    %13 = vector.multi_reduction <add>, %12, %cst_8 [1, 2] : vector<1x16x16xf32> to vector<1xf32>
    %14 = vector.shape_cast %13 : vector<1xf32> to vector<1x1x1xf32>
    %15 = vector.extract %14[0, 0, 0] : f32 from vector<1x1x1xf32>
    %16 = vector.broadcast %15 : f32 to vector<1x1xf32>
    %cst_9 = arith.constant 6.250000e-02 : f32
    %17 = vector.broadcast %cst_9 : f32 to vector<1x1xf32>
    %18 = arith.mulf %16, %17 : vector<1x1xf32>
    %19 = vector.extract_strided_slice %8 {offsets = [16, 0], sizes = [16, 16], strides = [1, 1]} : vector<64x16xf32> to vector<16x16xf32>
    %20 = vector.broadcast %2 : vector<1x16xf32> to vector<16x16xf32>
    %21 = arith.mulf %19, %20 : vector<16x16xf32>
    %22 = vector.shape_cast %21 : vector<16x16xf32> to vector<1x16x16xf32>
    %cst_10 = arith.constant dense<0.000000e+00> : vector<1xf32>
    %23 = vector.multi_reduction <add>, %22, %cst_10 [1, 2] : vector<1x16x16xf32> to vector<1xf32>
    %24 = vector.shape_cast %23 : vector<1xf32> to vector<1x1x1xf32>
    %25 = vector.extract %24[0, 0, 0] : f32 from vector<1x1x1xf32>
    %26 = vector.broadcast %25 : f32 to vector<1x1xf32>
    %cst_11 = arith.constant 6.250000e-02 : f32
    %27 = vector.broadcast %cst_11 : f32 to vector<1x1xf32>
    %28 = arith.mulf %26, %27 : vector<1x1xf32>
    %29 = vector.extract_strided_slice %8 {offsets = [32, 0], sizes = [16, 16], strides = [1, 1]} : vector<64x16xf32> to vector<16x16xf32>
    %30 = vector.broadcast %2 : vector<1x16xf32> to vector<16x16xf32>
    %31 = arith.mulf %29, %30 : vector<16x16xf32>
    %32 = vector.shape_cast %31 : vector<16x16xf32> to vector<1x16x16xf32>
    %cst_12 = arith.constant dense<0.000000e+00> : vector<1xf32>
    %33 = vector.multi_reduction <add>, %32, %cst_12 [1, 2] : vector<1x16x16xf32> to vector<1xf32>
    %34 = vector.shape_cast %33 : vector<1xf32> to vector<1x1x1xf32>
    %35 = vector.extract %34[0, 0, 0] : f32 from vector<1x1x1xf32>
    %36 = vector.broadcast %35 : f32 to vector<1x1xf32>
    %cst_13 = arith.constant 6.250000e-02 : f32
    %37 = vector.broadcast %cst_13 : f32 to vector<1x1xf32>
    %38 = arith.mulf %36, %37 : vector<1x1xf32>
    %39 = vector.extract_strided_slice %8 {offsets = [48, 0], sizes = [16, 16], strides = [1, 1]} : vector<64x16xf32> to vector<16x16xf32>
    %40 = vector.broadcast %2 : vector<1x16xf32> to vector<16x16xf32>
    %41 = arith.mulf %39, %40 : vector<16x16xf32>
    %42 = vector.shape_cast %41 : vector<16x16xf32> to vector<1x16x16xf32>
    %cst_14 = arith.constant dense<0.000000e+00> : vector<1xf32>
    %43 = vector.multi_reduction <add>, %42, %cst_14 [1, 2] : vector<1x16x16xf32> to vector<1xf32>
    %44 = vector.shape_cast %43 : vector<1xf32> to vector<1x1x1xf32>
    %45 = vector.extract %44[0, 0, 0] : f32 from vector<1x1x1xf32>
    %46 = vector.broadcast %45 : f32 to vector<1x1xf32>
    %cst_15 = arith.constant 6.250000e-02 : f32
    %47 = vector.broadcast %cst_15 : f32 to vector<1x1xf32>
    %48 = arith.mulf %46, %47 : vector<1x1xf32>
    %49 = arith.maximumf %18, %28 : vector<1x1xf32>
    %50 = arith.maximumf %49, %38 : vector<1x1xf32>
    %51 = arith.maximumf %50, %48 : vector<1x1xf32>
    %52 = arith.subf %18, %51 : vector<1x1xf32>
    %53 = math.exp %52 : vector<1x1xf32>
    %54 = arith.subf %28, %51 : vector<1x1xf32>
    %55 = math.exp %54 : vector<1x1xf32>
    %56 = arith.subf %38, %51 : vector<1x1xf32>
    %57 = math.exp %56 : vector<1x1xf32>
    %58 = arith.subf %48, %51 : vector<1x1xf32>
    %59 = math.exp %58 : vector<1x1xf32>
    %60 = arith.addf %53, %55 : vector<1x1xf32>
    %61 = arith.addf %60, %57 : vector<1x1xf32>
    %62 = arith.addf %61, %59 : vector<1x1xf32>
    %cst_16 = arith.constant 1.000000e+00 : f32
    %63 = vector.broadcast %cst_16 : f32 to vector<1x1xf32>
    %64 = arith.divf %63, %62 : vector<1x1xf32>
    %65 = arith.mulf %53, %64 : vector<1x1xf32>
    %c0_17 = arith.constant 0 : index
    %c0_18 = arith.constant 0 : index
    %c0_19 = arith.constant 0 : index
    %66 = vector.load %arg0[%c0_17, %c0_18, %c0_19] : memref<4x16x32xf32, #tpu.memory_space<vmem>>, vector<1x16x32xf32>
    %67 = vector.shape_cast %66 : vector<1x16x32xf32> to vector<16x32xf32>
    %68 = vector.broadcast %65 : vector<1x1xf32> to vector<16x32xf32>
    %69 = arith.mulf %68, %67 : vector<16x32xf32>
    %70 = arith.mulf %55, %64 : vector<1x1xf32>
    %c1 = arith.constant 1 : index
    %c0_20 = arith.constant 0 : index
    %c0_21 = arith.constant 0 : index
    %71 = vector.load %arg0[%c1, %c0_20, %c0_21] : memref<4x16x32xf32, #tpu.memory_space<vmem>>, vector<1x16x32xf32>
    %72 = vector.shape_cast %71 : vector<1x16x32xf32> to vector<16x32xf32>
    %73 = vector.broadcast %70 : vector<1x1xf32> to vector<16x32xf32>
    %74 = arith.mulf %73, %72 : vector<16x32xf32>
    %75 = arith.addf %69, %74 : vector<16x32xf32>
    %76 = arith.mulf %57, %64 : vector<1x1xf32>
    %c2 = arith.constant 2 : index
    %c0_22 = arith.constant 0 : index
    %c0_23 = arith.constant 0 : index
    %77 = vector.load %arg0[%c2, %c0_22, %c0_23] : memref<4x16x32xf32, #tpu.memory_space<vmem>>, vector<1x16x32xf32>
    %78 = vector.shape_cast %77 : vector<1x16x32xf32> to vector<16x32xf32>
    %79 = vector.broadcast %76 : vector<1x1xf32> to vector<16x32xf32>
    %80 = arith.mulf %79, %78 : vector<16x32xf32>
    %81 = arith.addf %75, %80 : vector<16x32xf32>
    %82 = arith.mulf %59, %64 : vector<1x1xf32>
    %c3 = arith.constant 3 : index
    %c0_24 = arith.constant 0 : index
    %c0_25 = arith.constant 0 : index
    %83 = vector.load %arg0[%c3, %c0_24, %c0_25] : memref<4x16x32xf32, #tpu.memory_space<vmem>>, vector<1x16x32xf32>
    %84 = vector.shape_cast %83 : vector<1x16x32xf32> to vector<16x32xf32>
    %85 = vector.broadcast %82 : vector<1x1xf32> to vector<16x32xf32>
    %86 = arith.mulf %85, %84 : vector<16x32xf32>
    %87 = arith.addf %81, %86 : vector<16x32xf32>
    %c0_26 = arith.constant 0 : index
    %c0_27 = arith.constant 0 : index
    %88 = vector.load %arg4[%c0_26, %c0_27] : memref<16x32xf32, #tpu.memory_space<vmem>>, vector<16x32xf32>
    tpu.vector_store %arg4[%c0_26, %c0_27], %87 {strides = array<i32>} : memref<16x32xf32, #tpu.memory_space<vmem>>, vector<16x32xf32>,
    return
  }
}

</mosaic_0001>

<llo_original>
// kernel: tpu_custom_call.1
$region0: #{tpu_custom_call.1}
  #allocation0 [shape = 'u32[]', space=smem, size = 0x4, offset = 0x4, fixed_abs, tag = 'smem constant byte address 0x4 - core index']
  #allocation1 [shape = 'u32[144,128]{1,0:T(1,128)}', space=vmem, size = 0x12000, scoped, tag = 'internal scratch']
  %s0 = inlined_call_operand.hbm [shape: f32[4,16,32], index: 0, kind: input, shape index: {}]
  %s1 = inlined_call_operand.vmem [shape: f32[32,16], index: 1, kind: input, shape index: {}]
  %s2 = inlined_call_operand.vmem [shape: f32[1,16], index: 2, kind: input, shape index: {}]
  %s3 = inlined_call_operand.vmem [shape: f32[1,16], index: 3, kind: input, shape index: {}]
  %s4 = inlined_call_operand.hbm [shape: f32[16,32], index: 4, kind: output, shape index: {}]
  %s5 = sld [smem:[#allocation0]]
  $region30: #{tpu_custom_call.1} parent=0
    _
  %s7 = ssub.s32 1, %s5
  %s8 = scalar_select 0, %s7, %s5
  $region1: #{tpu_custom_call.1} parent=0
    #allocation2 [shape = 'u8[32768]{0}', space=vmem, size = 0x8000, scoped, tag = 'input window, operand 0, single buffered']
    #allocation3 [shape = 's32[1]{0}', space=sflag, size = 0x4, scoped, tag = 'scoped memory for tpu_custom_call.1']
    #allocation4 [shape = 's32[1]{0}', space=sflag, size = 0x4, scoped, tag = 'scoped memory for tpu_custom_call.1']
    #allocation5 [shape = 'u8[8192]{0}', space=vmem, size = 0x2000, scoped, tag = 'output window, operand 0, single buffered']
    %9 = vsyncpa [#allocation3], 0
    %10 = vsyncpa [#allocation4], 0
    // Predicated region
    $region2: #{tpu_custom_call.1} parent=1 // pred_check
      _
    $region3: #{tpu_custom_call.1} parent=1 // pred_check_branch
      %12 = sbr.rel (0) target = $region5
    $region4: #{tpu_custom_call.1} parent=1 // pred_region
      %s14 = ssub.s32 1024, 1024
      %15 = vsyncadd [#allocation3], %s14
      %s16 = sshll.u32 [#allocation2], 4
      %s17 = int_to_ptr.vmem [resolvable:$true] %s16
      %22 = dma.hbm_to_vmem [thread:$0]  %s0, 1024, %s17, [#allocation3], 128, 128, 8
    $region5: #{tpu_custom_call.1} parent=1 // pred_fallthru
      _
    // Predicated region
    $region6: #{tpu_custom_call.1} parent=1 // pred_check
      _
    $region7: #{tpu_custom_call.1} parent=1 // pred_check_branch
      %24 = sbr.rel (0) target = $region9
    $region8: #{tpu_custom_call.1} parent=1 // pred_region
      _
    $region9: #{tpu_custom_call.1} parent=1 // pred_fallthru
      _
    // Predicated region
    $region10: #{tpu_custom_call.1} parent=1 // pred_check
      _
    $region11: #{tpu_custom_call.1} parent=1 // pred_check_branch
      %26 = sbr.rel (0) target = $region13
    $region12: #{tpu_custom_call.1} parent=1 // pred_region
      _
    $region13: #{tpu_custom_call.1} parent=1 // pred_fallthru
      _
    // Predicated region
    $region14: #{tpu_custom_call.1} parent=1 // pred_check
      _
    $region15: #{tpu_custom_call.1} parent=1 // pred_check_branch
      %28 = sbr.rel (0) target = $region17
    $region16: #{tpu_custom_call.1} parent=1 // pred_region
      _
    $region17: #{tpu_custom_call.1} parent=1 // pred_fallthru
      _
    // Predicated region
    $region18: #{tpu_custom_call.1} parent=1 // pred_check
      _
    $region19: #{tpu_custom_call.1} parent=1 // pred_check_branch
      %30 = sbr.rel (0) target = $region21
    $region20: #{tpu_custom_call.1} parent=1 // pred_region
      %31 = dma.done [#allocation3], 1024
    $region21: #{tpu_custom_call.1} parent=1 // pred_fallthru
      _
    %v32 = vld [vmem:[%s1] sm:$0xff]
    %v33 = vld [vmem:[%s1 + $0x8] sm:$0xff]
    %v34 = vld [vmem:[%s1 + $0x10] sm:$0xff]
    %v35 = vld [vmem:[%s1 + $0x18] sm:$0xff]
    %v36 = vld [vmem:[%s2] sm:$0x1]
    %v37 = vld [vmem:[%s3] sm:$0x1]
    %v38 = vld [vmem:[#allocation2] sm:$0xff]
    %v39 = vld [vmem:[#allocation2 + $0x8] sm:$0xff]
    %v40 = vld [vmem:[#allocation2 + $0x10] sm:$0xff]
    %v41 = vld [vmem:[#allocation2 + $0x18] sm:$0xff]
    %v42 = vld [vmem:[#allocation2 + $0x20] sm:$0xff]
    %v43 = vld [vmem:[#allocation2 + $0x28] sm:$0xff]
    %v44 = vld [vmem:[#allocation2 + $0x30] sm:$0xff]
    %v45 = vld [vmem:[#allocation2 + $0x38] sm:$0xff]
    %v47 = vlaneseq
    %v48 = vshrl.u32 %v47, 7
    %v49 = vsub.s32 0, %v48
    %v50 = vrot.slane %v36, %v49
    %vm52 = vcmask 261120
    %v54 = vsel %vm52, %v38, 0
    %v57 = vsel %vm52, %v39, 0
    %v60 = vsel %vm52, %v40, 0
    %v63 = vsel %vm52, %v41, 0
    %v66 = vsel %vm52, %v42, 0
    %v69 = vsel %vm52, %v43, 0
    %v72 = vsel %vm52, %v44, 0
    %v75 = vsel %vm52, %v45, 0
    %77 = vmatprep.subr.mxu0 0.0
    %78 = vmatpush1.msra.mxu0 %v32
    %79 = vmatprep.subr.mxu0 0.0
    %80 = vmatpush1.msra.mxu0 %v33
    %81 = vmatprep.subr.mxu0 0.0
    %82 = vmatpush1.msra.mxu0 %v34
    %83 = vmatprep.subr.mxu0 0.0
    %84 = vmatpush1.msra.mxu0 %v35
    %85 = vmatprep.subr.mxu0 0.0
    %86 = vmatpush1.msra.mxu0 0.0
    %87 = vmatprep.subr.mxu0 0.0
    %88 = vmatpush1.msra.mxu0 0.0
    %89 = vmatprep.subr.mxu0 0.0
    %90 = vmatpush1.msra.mxu0 0.0
    %91 = vmatprep.subr.mxu0 0.0
    %92 = vmatpush1.msra.mxu0 0.0
    %93 = vmatprep.subr.mxu0 0.0
    %94 = vmatpush1.msra.mxu0 0.0
    %95 = vmatprep.subr.mxu0 0.0
    %96 = vmatpush1.msra.mxu0 0.0
    %97 = vmatprep.subr.mxu0 0.0
    %98 = vmatpush1.msra.mxu0 0.0
    %99 = vmatprep.subr.mxu0 0.0
    %100 = vmatpush1.msra.mxu0 0.0
    %101 = vmatprep.subr.mxu0 0.0
    %102 = vmatpush1.msra.mxu0 0.0
    %103 = vmatprep.subr.mxu0 0.0
    %104 = vmatpush1.msra.mxu0 0.0
    %105 = vmatprep.subr.mxu0 0.0
    %106 = vmatpush1.msra.mxu0 0.0
    %107 = vmatprep.subr.mxu0 0.0
    %108 = vmatpush1.msra.mxu0 0.0
    %109 = vmatprep.subr.mxu0 0.0
    %110 = vmatpush1.msra.mxu0 0.0
    %111 = vmatprep.subr.mxu0 0.0
    %112 = vmatpush1.msra.mxu0 0.0
    %113 = vmatprep.subr.mxu0 0.0
    %114 = vmatpush1.msra.mxu0 0.0
    %115 = vmatprep.subr.mxu0 0.0
    %116 = vmatpush1.msra.mxu0 0.0
    %117 = vmatprep.subr.mxu0 0.0
    %118 = vmatpush1.msra.mxu0 0.0
    %119 = vmatprep.subr.mxu0 0.0
    %120 = vmatpush1.msra.mxu0 0.0
    %121 = vmatprep.subr.mxu0 0.0
    %122 = vmatpush1.msra.mxu0 0.0
    %123 = vmatprep.subr.mxu0 0.0
    %124 = vmatpush1.msra.mxu0 0.0
    %125 = vmatprep.subr.mxu0 0.0
    %126 = vmatpush1.msra.mxu0 0.0
    %127 = vmatprep.subr.mxu0 0.0
    %128 = vmatpush1.msra.mxu0 0.0
    %129 = vmatprep.subr.mxu0 0.0
    %130 = vmatpush1.msra.mxu0 0.0
    %131 = vmatprep.subr.mxu0 0.0
    %132 = vmatpush1.msra.mxu0 0.0
    %133 = vmatprep.subr.mxu0 0.0
    %134 = vmatpush1.msra.mxu0 0.0
    %135 = vmatprep.subr.mxu0 0.0
    %136 = vmatpush1.msra.mxu0 0.0
    %137 = vmatprep.subr.mxu0 0.0
    %138 = vmatpush1.msra.mxu0 0.0
    %139 = vmatprep.subr.mxu0 0.0
    %140 = vmatpush1.msra.mxu0 0.0
    %141 = vmatprep.mubr.f32.mxu0 0.0
    %142 = vmatmul.mubr.f32.gmra.mrb[0].mxu0 %v54
    %v143 = vpop.f32.mrb[0].mxu0
    %v144 = vadd.f32 %v50, %v143
    %v145 = vpop.f32.mrb[0].mxu0
    %146 = vmatprep.mubr.f32.mxu0 0.0
    %147 = vmatmul.mubr.f32.gmra.mrb[0].mxu0 %v57
    %v148 = vpop.f32.mrb[0].mxu0
    %v149 = vadd.f32 %v50, %v148
    %v150 = vpop.f32.mrb[0].mxu0
    %151 = vmatprep.mubr.f32.mxu0 0.0
    %152 = vmatmul.mubr.f32.gmra.mrb[0].mxu0 %v60
    %v153 = vpop.f32.mrb[0].mxu0
    %v154 = vadd.f32 %v50, %v153
    %v155 = vpop.f32.mrb[0].mxu0
    %156 = vmatprep.mubr.f32.mxu0 0.0
    %157 = vmatmul.mubr.f32.gmra.mrb[0].mxu0 %v63
    %v158 = vpop.f32.mrb[0].mxu0
    %v159 = vadd.f32 %v50, %v158
    %v160 = vpop.f32.mrb[0].mxu0
    %161 = vmatprep.mubr.f32.mxu0 0.0
    %162 = vmatmul.mubr.f32.gmra.mrb[0].mxu0 %v66
    %v163 = vpop.f32.mrb[0].mxu0
    %v164 = vadd.f32 %v50, %v163
    %v165 = vpop.f32.mrb[0].mxu0
    %166 = vmatprep.mubr.f32.mxu0 0.0
    %167 = vmatmul.mubr.f32.gmra.mrb[0].mxu0 %v69
    %v168 = vpop.f32.mrb[0].mxu0
    %v169 = vadd.f32 %v50, %v168
    %v170 = vpop.f32.mrb[0].mxu0
    %171 = vmatprep.mubr.f32.mxu0 0.0
    %172 = vmatmul.mubr.f32.gmra.mrb[0].mxu0 %v72
    %v173 = vpop.f32.mrb[0].mxu0
    %v174 = vadd.f32 %v50, %v173
    %v175 = vpop.f32.mrb[0].mxu0
    %176 = vmatprep.mubr.f32.mxu0 0.0
    %177 = vmatmul.mubr.f32.gmra.mrb[0].mxu0 %v75
    %v178 = vpop.f32.mrb[0].mxu0
    %v179 = vadd.f32 %v50, %v178
    %v180 = vpop.f32.mrb[0].mxu0
    %181 = vdwg.mxu0
    %v182 = vtanh.pop %v144
    %v183 = vtanh.pop %v149
    %v184 = vtanh.pop %v154
    %v185 = vtanh.pop %v159
    %v186 = vtanh.pop %v164
    %v187 = vtanh.pop %v169
    %v188 = vtanh.pop %v174
    %v189 = vtanh.pop %v179
    %v191 = vlaneseq
    %v192 = vshrl.u32 %v191, 7
    %v193 = vsub.s32 0, %v192
    %v194 = vrot.slane %v37, %v193
    %v196 = vmul.f32 %v182, %v194
    %v197 = vmul.f32 %v183, %v194
    %vm198 = vcmask 130048
    %v199 = vsel %vm198, %v196, 0.0
    %v200 = vsel %vm198, %v197, 0.0
    %v201 = vadd.f32 %v199, %v200
    %202 = vadd.xlane.f32.xlu0 %v201
    %v203 = vpop.xlane.xlu0 %202
    %v204 = vrot.slane %v203, 4
    %v205 = vadd.f32 %v203, %v204
    %v206 = vrot.slane %v205, 2
    %v207 = vadd.f32 %v205, %v206
    %v208 = vrot.slane %v207, 1
    %v209 = vadd.f32 %v207, %v208
    %s210 = vtos %v209
    %v211 = vstv %s210
    %v212 = vmul.f32 %v211, 0.0625
    %v213 = vmul.f32 %v184, %v194
    %v214 = vmul.f32 %v185, %v194
    %v215 = vsel %vm198, %v213, 0.0
    %v216 = vsel %vm198, %v214, 0.0
    %v217 = vadd.f32 %v215, %v216
    %218 = vadd.xlane.f32.xlu0 %v217
    %v219 = vpop.xlane.xlu0 %218
    %v220 = vrot.slane %v219, 4
    %v221 = vadd.f32 %v219, %v220
    %v222 = vrot.slane %v221, 2
    %v223 = vadd.f32 %v221, %v222
    %v224 = vrot.slane %v223, 1
    %v225 = vadd.f32 %v223, %v224
    %s226 = vtos %v225
    %v227 = vstv %s226
    %v228 = vmul.f32 %v227, 0.0625
    %v229 = vmul.f32 %v186, %v194
    %v230 = vmul.f32 %v187, %v194
    %v231 = vsel %vm198, %v229, 0.0
    %v232 = vsel %vm198, %v230, 0.0
    %v233 = vadd.f32 %v231, %v232
    %234 = vadd.xlane.f32.xlu0 %v233
    %v235 = vpop.xlane.xlu0 %234
    %v236 = vrot.slane %v235, 4
    %v237 = vadd.f32 %v235, %v236
    %v238 = vrot.slane %v237, 2
    %v239 = vadd.f32 %v237, %v238
    %v240 = vrot.slane %v239, 1
    %v241 = vadd.f32 %v239, %v240
    %s242 = vtos %v241
    %v243 = vstv %s242
    %v244 = vmul.f32 %v243, 0.0625
    %v245 = vmul.f32 %v188, %v194
    %v246 = vmul.f32 %v189, %v194
    %v247 = vsel %vm198, %v245, 0.0
    %v248 = vsel %vm198, %v246, 0.0
    %v249 = vadd.f32 %v247, %v248
    %250 = vadd.xlane.f32.xlu0 %v249
    %v251 = vpop.xlane.xlu0 %250
    %v252 = vrot.slane %v251, 4
    %v253 = vadd.f32 %v251, %v252
    %v254 = vrot.slane %v253, 2
    %v255 = vadd.f32 %v253, %v254
    %v256 = vrot.slane %v255, 1
    %v257 = vadd.f32 %v255, %v256
    %s258 = vtos %v257
    %v259 = vstv %s258
    %v260 = vmul.f32 %v259, 0.0625
    %v261 = vmax.f32 %v212, %v228
    %v262 = vmax.f32 %v261, %v244
    %v263 = vmax.f32 %v262, %v260
    %v264 = vsub.f32 %v212, %v263
    %v265 = vmul.f32 %v264, 1.442695
    %v266 = vpow.pop %v265
    %v267 = vsub.f32 %v228, %v263
    %v268 = vmul.f32 %v267, 1.442695
    %v269 = vpow.pop %v268
    %v270 = vsub.f32 %v244, %v263
    %v271 = vmul.f32 %v270, 1.442695
    %v272 = vpow.pop %v271
    %v273 = vsub.f32 %v260, %v263
    %v274 = vmul.f32 %v273, 1.442695
    %v275 = vpow.pop %v274
    %v276 = vadd.f32 %v266, %v269
    %v277 = vadd.f32 %v276, %v272
    %v278 = vadd.f32 %v277, %v275
    %v279 = vrcp.pop %v278
    %v280 = vmul.f32 1.0, %v279
    %v281 = vmul.f32 %v266, %v280
    %v282 = vld [vmem:[#allocation2] sm:$0xff]
    %v283 = vld [vmem:[#allocation2 + $0x8] sm:$0xff]
    %v284 = vmul.f32 %v281, %v282
    %v285 = vmul.f32 %v281, %v283
    %v286 = vmul.f32 %v269, %v280
    %s287 = scalar_lea.vmem [#allocation2], 16
    %v288 = vld [vmem:[%s287] sm:$0xff]
    %v289 = vld [vmem:[%s287 + $0x8] sm:$0xff]
    %v290 = vmul.f32 %v286, %v288
    %v291 = vmul.f32 %v286, %v289
    %v292 = vadd.f32 %v284, %v290
    %v293 = vadd.f32 %v285, %v291
    %v294 = vmul.f32 %v272, %v280
    %s295 = scalar_lea.vmem [#allocation2], 32
    %v296 = vld [vmem:[%s295] sm:$0xff]
    %v297 = vld [vmem:[%s295 + $0x8] sm:$0xff]
    %v298 = vmul.f32 %v294, %v296
    %v299 = vmul.f32 %v294, %v297
    %v300 = vadd.f32 %v292, %v298
    %v301 = vadd.f32 %v293, %v299
    %v302 = vmul.f32 %v275, %v280
    %s303 = scalar_lea.vmem [#allocation2], 48
    %v304 = vld [vmem:[%s303] sm:$0xff]
    %v305 = vld [vmem:[%s303 + $0x8] sm:$0xff]
    %v306 = vmul.f32 %v302, %v304
    %v307 = vmul.f32 %v302, %v305
    %v308 = vadd.f32 %v300, %v306
    %v309 = vadd.f32 %v301, %v307
    %310 = vst.msk [vmem:[#allocation5] sm:$0xff] %vm52, %v308
    %311 = vst.msk [vmem:[#allocation5 + $0x8] sm:$0xff] %vm52, %v309
    // Predicated region
    $region22: #{tpu_custom_call.1} parent=1 // pred_check
      _
    $region23: #{tpu_custom_call.1} parent=1 // pred_check_branch
      %313 = sbr.rel (0) target = $region25
    $region24: #{tpu_custom_call.1} parent=1 // pred_region
      %s315 = ssub.s32 256, 256
      %316 = vsyncadd [#allocation4], %s315
      %s317 = sshll.u32 [#allocation5], 4
      %s318 = int_to_ptr.vmem [resolvable:$true] %s317
      %323 = dma.vmem_to_hbm [thread:$0]  %s318, 256, %s4, [#allocation4], 128, 128, 8
    $region25: #{tpu_custom_call.1} parent=1 // pred_fallthru
      _
    // Predicated region
    $region26: #{tpu_custom_call.1} parent=1 // pred_check
      _
    $region27: #{tpu_custom_call.1} parent=1 // pred_check_branch
      %325 = sbr.rel (0) target = $region29
    $region28: #{tpu_custom_call.1} parent=1 // pred_region
      %326 = dma.done [#allocation4], 256
    $region29: #{tpu_custom_call.1} parent=1 // pred_fallthru
      _
    %327 = vsyncpa [#allocation3], 1
    %328 = vsyncpa [#allocation4], 1

</llo_original>
